<compile_context>
chip_gen: v6e
topology: v6e:2x2x1
jax: 0.10.0
libtpu: 0.0.40
codegen_flags: <defaults>
</compile_context>

<pallas_src>
import math

import jax
import jax.numpy as jnp
from jax.experimental import pallas as pl
from jax.experimental.pallas import tpu as pltpu


_MASK_VALUE = -1e30  # large finite; avoids -inf -> NaN in the online softmax


def _device_kind():
    try:
        d = jax.devices()[0]
        if d.platform != "tpu":
            return ""
        return d.device_kind.lower()
    except Exception:  # pragma: no cover
        return ""


_KIND = _device_kind()
_IS_V6 = "v6" in _KIND

# Generation-aware matmul tile caps:
#  * v6e: 1024x1024 output tiles (~1024 flop/byte, above the ~650 flop/byte
#    bf16 roofline); pin scoped VMEM explicitly.
#  * v7x: half the VMEM (64 MiB) and 3.2 TB/s HBM -> 512 tiles already
#    compute-bound; keep tn/tk 256-aligned for the 2x256^2 MXU.
#  * v5e / unknown: 512 tiles are compute-bound and fit the 16 MiB default
#    scoped-VMEM limit.
if _IS_V6:
    _LIN_TM_CAND = (1024, 512, 256, 128, 64, 32, 16, 8)
    _LIN_TN_CAND = (1024, 512, 256, 128)
    _LIN_TK_CAND = (512, 256, 128)
    _LIN_VMEM_LIMIT = 64 * 1024 * 1024
else:
    _LIN_TM_CAND = (512, 256, 128, 64, 32, 16, 8)
    _LIN_TN_CAND = (512, 256, 128)
    _LIN_TK_CAND = (512, 256, 128)
    _LIN_VMEM_LIMIT = None

# Bigger q tiles cut K/V HBM re-reads ((T/tq) * T * D * 2 * 2B) and grid-step
# overhead; VMEM cost at tq=1024, tk=512, D=128 is only ~2 MB double-buffered.
_ATTN_TQ_CAND = (1024, 512, 256, 128, 64, 32, 16, 8)
_ATTN_TK_CAND = (512, 256, 128)


def _pick_tile(dim, candidates):
    """Largest candidate that evenly divides `dim`, else the full dim.

    The full-dim fallback keeps toy shapes legal (block == full array dim);
    for production shapes pad / assert divisibility so sublane layout stays
    (8, 128) aligned.
    """
    for c in candidates:
        if c <= dim and dim % c == 0:
            return c
    return dim


def _to_bf16(x):
    return x if x.dtype == jnp.bfloat16 else x.astype(jnp.bfloat16)


# ----------------------------------------------------------------------------
# Kernel 1: tiled dense linear   y = x @ W + b
#   grid = (N/tm, Cout/tn, Cin/tk); fp32 accumulator; bf16 MXU operands.
# ----------------------------------------------------------------------------
def _linear_kernel(x_ref, w_ref, b_ref, o_ref, acc_ref):
    @pl.when(pl.program_id(2) == 0)
    def _():
        acc_ref[...] = jnp.zeros_like(acc_ref)

    acc_ref[...] += jnp.dot(
        x_ref[...], w_ref[...], preferred_element_type=jnp.float32
    )

    @pl.when(pl.program_id(2) == pl.num_programs(2) - 1)
    def _():
        o_ref[...] = (acc_ref[...] + b_ref[...].astype(jnp.float32)).astype(
            o_ref.dtype
        )


def linear(x2d, w, b, out_dtype=jnp.float32):
    """x2d: (N, Cin), w: (Cin, Cout), b: (1, Cout) -> (N, Cout)."""
    N, Cin = x2d.shape
    Cout = w.shape[1]
    tm = _pick_tile(N, _LIN_TM_CAND)
    tn = _pick_tile(Cout, _LIN_TN_CAND)
    tk = _pick_tile(Cin, _LIN_TK_CAND)

    # Weights are expected to already live in bf16 at parameter level (no
    # per-call HBM cast pass); _to_bf16 is then a no-op.
    xb = _to_bf16(x2d)
    wb = _to_bf16(w)

    flops = 2 * N * Cin * Cout
    bytes_accessed = int(
        2 * (N * Cin + Cin * Cout)
        + 4 * Cout
        + jnp.dtype(out_dtype).itemsize * N * Cout
    )

    return pl.pallas_call(
        _linear_kernel,
        out_shape=jax.ShapeDtypeStruct((N, Cout), out_dtype),
        grid=(N // tm, Cout // tn, Cin // tk),
        in_specs=[
            pl.BlockSpec((tm, tk), lambda i, j, k: (i, k)),
            pl.BlockSpec((tk, tn), lambda i, j, k: (k, j)),
            pl.BlockSpec((1, tn), lambda i, j, k: (0, j)),
        ],
        out_specs=pl.BlockSpec((tm, tn), lambda i, j, k: (i, j)),
        scratch_shapes=[pltpu.VMEM((tm, tn), jnp.float32)],
        compiler_params=pltpu.CompilerParams(
            dimension_semantics=("parallel", "parallel", "arbitrary"),
            vmem_limit_bytes=_LIN_VMEM_LIMIT,
        ),
        cost_estimate=pl.CostEstimate(
            flops=flops, transcendentals=0, bytes_accessed=bytes_accessed
        ),
    )(xb, wb, b.astype(jnp.float32))


# ----------------------------------------------------------------------------
# Kernel 2: flash-style attention with online softmax.
#   grid = (B, H, T/tq, T/tk); running max / denom / acc in VMEM scratch.
#   All q/k/v/out/bias refs arrive squeezed to 2-D tiles so the same kernel
#   body serves both the flat (B*T, 3C) layout and the (B, H, T, D) fallback.
# ----------------------------------------------------------------------------
def _make_flash_kernel(scale, has_bias, causal, tq, tk, approx_recip):
    def kernel(*refs):
        if has_bias:
            q_ref, k_ref, v_ref, bias_ref, o_ref, m_sc, l_sc, acc_sc = refs
        else:
            q_ref, k_ref, v_ref, o_ref, m_sc, l_sc, acc_sc = refs
            bias_ref = None

        qi = pl.program_id(2)
        ki = pl.program_id(3)

        @pl.when(ki == 0)
        def _():
            # Large-finite init (not -inf): keeps alpha/p NaN-free even when a
            # bias contains -inf or a whole block is masked.
            m_sc[...] = jnp.full_like(m_sc, _MASK_VALUE)
            l_sc[...] = jnp.zeros_like(l_sc)
            acc_sc[...] = jnp.zeros_like(acc_sc)

        def compute():
            # Scale Q once (tq*D mults) instead of the (tq, tk) score matrix.
            q = q_ref[...] * scale  # (tq, D) bf16
            k = k_ref[...]          # (tk, D) bf16
            v = v_ref[...]          # (tk, D) bf16

            # q @ k^T with the transpose folded into the contraction dims.
            s = jax.lax.dot_general(
                q, k, (((1,), (1,)), ((), ())),
                preferred_element_type=jnp.float32,
            )  # (tq, tk) fp32
            if has_bias:
                s = s + bias_ref[...].astype(jnp.float32)
            if causal:
                row = qi * tq + jax.lax.broadcasted_iota(jnp.int32, (tq, tk), 0)
                col = ki * tk + jax.lax.broadcasted_iota(jnp.int32, (tq, tk), 1)
                s = jnp.where(row >= col, s, _MASK_VALUE)

            m_prev = m_sc[...]  # (tq, 1)
            m_new = jnp.maximum(m_prev, jnp.max(s, axis=-1, keepdims=True))
            alpha = jnp.exp(m_prev - m_new)
            p = jnp.exp(s - m_new)  # fp32
            l_sc[...] = alpha * l_sc[...] + jnp.sum(p, axis=-1, keepdims=True)
            acc_sc[...] = alpha * acc_sc[...] + jnp.dot(
                p.astype(v.dtype), v, preferred_element_type=jnp.float32
            )
            m_sc[...] = m_new

        if causal:
            # Skip KV blocks entirely above the diagonal (~2x less MXU / EUP /
            # VPU work); init and finalize stay outside the guard.
            pl.when(ki * tk < (qi + 1) * tq)(compute)
        else:
            compute()

        @pl.when(ki == pl.num_programs(3) - 1)
        def _():
            l = l_sc[...]
            l = jnp.where(l > 0.0, l, 1.0)  # fully-masked rows -> output 0
            o_ref[...] = (
                acc_sc[...] * pl.reciprocal(l, approx=approx_recip)
            ).astype(o_ref.dtype)

    return kernel


def _flash_call(inputs, in_specs, out_shape, out_spec, grid, tq, tk, T, D,
                scale, has_bias, causal, out_dtype, bias_bytes):
    # approx reciprocal is fine for bf16 output; use exact rsqrt-free divide
    # when fp32 accuracy is requested.
    approx = jnp.dtype(out_dtype) == jnp.dtype(jnp.bfloat16)
    kernel = _make_flash_kernel(scale, has_bias, causal, tq, tk, approx)
    B, H = grid[0], grid[1]
    work = 0.5 if causal else 1.0
    flops = int(4 * B * H * T * T * D * work)
    transcendentals = int(B * H * T * T * work)
    itemsize = jnp.dtype(out_dtype).itemsize
    bytes_accessed = int(
        3 * B * H * T * D * 2 + B * H * T * D * itemsize + bias_bytes
    )
    # NOTE(v7x): parallel prefix B*H*(T//tq) must provide >=2 partitions so
    # both TensorCores are used; with tq capped at 1024 this holds for any
    # realistic B*H.
    # TODO(synk): consider pipeline_mode=pl.Buffered(3) on the K/V specs if
    # DMA remains exposed at very long T.
    return pl.pallas_call(
        kernel,
        out_shape=out_shape,
        grid=grid,
        in_specs=in_specs,
        out_specs=out_spec,
        scratch_shapes=[
            pltpu.VMEM((tq, 1), jnp.float32),   # running max
            pltpu.VMEM((tq, 1), jnp.float32),   # running denom
            pltpu.VMEM((tq, D), jnp.float32),   # output accumulator
        ],
        compiler_params=pltpu.CompilerParams(
            dimension_semantics=("parallel", "parallel", "parallel", "arbitrary")
        ),
        cost_estimate=pl.CostEstimate(
            flops=flops, transcendentals=transcendentals,
            bytes_accessed=bytes_accessed,
        ),
    )(*inputs)


def _prep_bias(bias, T):
    """Slice to (.., T, T) and cast to bf16 (halves the per-(b,h) DMA)."""
    bias = bias[:, :, :T, :T]
    return _to_bf16(bias)


def attention_from_qkv2d(qkv2d, B, T, H, D, bias=None, causal=False,
                         out_dtype=jnp.bfloat16):
    """Flash attention reading Q/K/V straight out of the (B*T, 3*H*D) c_attn
    output and writing a (B*T, H*D) output — zero HBM transposes.  Requires
    D % 128 == 0 so blocks stay lane-dense."""
    scale = 1.0 / math.sqrt(D)
    tq = _pick_tile(T, _ATTN_TQ_CAND)
    tk = _pick_tile(T, _ATTN_TK_CAND)
    qsteps, ksteps = T // tq, T // tk
    grid = (B, H, qsteps, ksteps)

    # Row block index b*(T//t) + step selects the (b, t) rows; column block
    # index h / H+h / 2H+h selects head h of q / k / v inside the fused 3C.
    q_spec = pl.BlockSpec((tq, D), lambda b, h, qi, ki: (b * qsteps + qi, h))
    k_spec = pl.BlockSpec((tk, D), lambda b, h, qi, ki: (b * ksteps + ki, H + h))
    v_spec = pl.BlockSpec(
        (tk, D), lambda b, h, qi, ki: (b * ksteps + ki, 2 * H + h))
    out_spec = pl.BlockSpec((tq, D), lambda b, h, qi, ki: (b * qsteps + qi, h))

    in_specs = [q_spec, k_spec, v_spec]
    inputs = [qkv2d, qkv2d, qkv2d]
    bias_bytes = 0
    has_bias = bias is not None
    if has_bias:
        bias = _prep_bias(bias, T)
        bcast_b = bias.shape[0] > 1
        bcast_h = bias.shape[1] > 1
        in_specs.append(
            pl.BlockSpec(
                (None, None, tq, tk),
                lambda b, h, qi, ki: (
                    b if bcast_b else 0, h if bcast_h else 0, qi, ki),
            )
        )
        inputs.append(bias)
        bias_bytes = bias.size * 2

    out_shape = jax.ShapeDtypeStruct((B * T, H * D), out_dtype)
    return _flash_call(inputs, in_specs, out_shape, out_spec, grid, tq, tk, T,
                       D, scale, has_bias, causal, out_dtype, bias_bytes)


def attention_bhtd(q, k, v, bias=None, causal=False, out_dtype=jnp.bfloat16):
    """Fallback flash attention on (B, H, T, D) tensors for head dims that are
    not lane-aligned (D % 128 != 0); XLA transposes happen outside."""
    B, H, T, D = q.shape
    scale = 1.0 / math.sqrt(D)
    tq = _pick_tile(T, _ATTN_TQ_CAND)
    tk = _pick_tile(T, _ATTN_TK_CAND)
    grid = (B, H, T // tq, T // tk)

    qb, kb, vb = _to_bf16(q), _to_bf16(k), _to_bf16(v)

    q_spec = pl.BlockSpec((None, None, tq, D), lambda b, h, qi, ki: (b, h, qi, 0))
    kv_spec = pl.BlockSpec((None, None, tk, D), lambda b, h, qi, ki: (b, h, ki, 0))
    out_spec = pl.BlockSpec((None, None, tq, D), lambda b, h, qi, ki: (b, h, qi, 0))

    in_specs = [q_spec, kv_spec, kv_spec]
    inputs = [qb, kb, vb]
    bias_bytes = 0
    has_bias = bias is not None
    if has_bias:
        bias = _prep_bias(bias, T)
        bcast_b = bias.shape[0] > 1
        bcast_h = bias.shape[1] > 1
        in_specs.append(
            pl.BlockSpec(
                (None, None, tq, tk),
                lambda b, h, qi, ki: (
                    b if bcast_b else 0, h if bcast_h else 0, qi, ki),
            )
        )
        inputs.append(bias)
        bias_bytes = bias.size * 2

    out_shape = jax.ShapeDtypeStruct((B, H, T, D), out_dtype)
    return _flash_call(inputs, in_specs, out_shape, out_spec, grid, tq, tk, T,
                       D, scale, has_bias, causal, out_dtype, bias_bytes)


# ----------------------------------------------------------------------------
# Wrapper reproducing SelfAttention.forward (dropout = identity in eval mode)
# ----------------------------------------------------------------------------
def self_attention_forward(x, params, n_heads, attention_bias=None,
                           causal=False):
    """x: (B, T, C).  `attention_bias` is a 4-D broadcastable bias added to the
    scores (cast to bf16 inside).  `causal=True` instead generates the causal
    mask in-kernel — prefer it over a causal attention_bias (no bias DMA)."""
    B, T, C = x.shape
    H = n_heads
    D = C // H

    # c_attn: fused QKV projection, kept flat as (B*T, 3C) bf16.
    qkv = linear(
        x.reshape(B * T, C), params["w_attn"], params["b_attn"],
        out_dtype=jnp.bfloat16,
    )

    use_flat = (D % 128 == 0) and (T % 8 == 0)
    if use_flat:
        # Transposeless: attention reads Q/K/V directly from the flat qkv
        # buffer and writes a (B*T, C) output that feeds c_proj as-is.
        y2d = attention_from_qkv2d(
            qkv, B, T, H, D, bias=attention_bias, causal=causal,
            out_dtype=jnp.bfloat16,
        )
    else:
        # Small / non-lane-aligned head dims: fall back to XLA transposes into
        # (B, H, T, D) so block last-two-dims stay tile-aligned.
        qkv5 = qkv.reshape(B, T, 3, H, D)
        q = qkv5[:, :, 0].transpose(0, 2, 1, 3)
        k = qkv5[:, :, 1].transpose(0, 2, 1, 3)
        v = qkv5[:, :, 2].transpose(0, 2, 1, 3)
        y = attention_bhtd(q, k, v, bias=attention_bias, causal=causal,
                           out_dtype=jnp.bfloat16)
        y2d = y.transpose(0, 2, 1, 3).reshape(B * T, C)

    # c_proj (+ resid_dropout == identity in eval mode).
    y2d = linear(y2d, params["w_proj"], params["b_proj"], out_dtype=jnp.float32)
    return y2d.reshape(B, T, C)


# ----------------------------------------------------------------------------
# Pure-JAX fp32 reference for sanity checks
# ----------------------------------------------------------------------------
def reference_forward(x, params, n_heads, attention_bias=None):
    B, T, C = x.shape
    H, D = n_heads, C // n_heads
    w_attn = params["w_attn"].astype(jnp.float32)
    b_attn = params["b_attn"].astype(jnp.float32)
    w_proj = params["w_proj"].astype(jnp.float32)
    b_proj = params["b_proj"].astype(jnp.float32)
    qkv = x @ w_attn + b_attn[0]
    q, k, v = jnp.split(qkv, 3, axis=2)
    q = q.reshape(B, T, H, D).transpose(0, 2, 1, 3)
    k = k.reshape(B, T, H, D).transpose(0, 2, 1, 3)
    v = v.reshape(B, T, H, D).transpose(0, 2, 1, 3)
    att = jnp.einsum("bhqd,bhkd->bhqk", q, k) / math.sqrt(D)
    if attention_bias is not None:
        att = att + attention_bias[:, :, :T, :T]
    att = jax.nn.softmax(att, axis=-1)
    y = jnp.einsum("bhqk,bhkd->bhqd", att, v)
    y = y.transpose(0, 2, 1, 3).reshape(B, T, C)
    return y @ w_proj + b_proj[0]


if __name__ == "__main__":
    def make_params(key, C):
        k_wa, k_ba, k_wp, k_bp = jax.random.split(key, 4)
        bound = 1.0 / math.sqrt(C)
        w_attn = jax.random.uniform(k_wa, (C, 3 * C), jnp.float32, -bound, bound)
        b_attn = jax.random.uniform(k_ba, (1, 3 * C), jnp.float32, -bound, bound)
        w_proj = jax.random.uniform(k_wp, (C, C), jnp.float32, -bound, bound)
        b_proj = jax.random.uniform(k_bp, (1, C), jnp.float32, -bound, bound)
        # Store weights in bf16 at parameter level (no per-call HBM cast);
        # the reference uses the same bf16-quantized values in fp32 math.
        params = {
            "w_attn": w_attn.astype(jnp.bfloat16), "b_attn": b_attn,
            "w_proj": w_proj.astype(jnp.bfloat16), "b_proj": b_proj,
        }
        params_ref = {k: v.astype(jnp.float32) for k, v in params.items()}
        return params, params_ref

    def causal_bias(T):
        return jnp.where(
            jnp.tril(jnp.ones((T, T), dtype=bool)), 0.0, -1e9
        )[None, None, :, :].astype(jnp.float32)

    key = jax.random.PRNGKey(0)
    k_small, k_big = jax.random.split(key)

    # ---------------- Small config (D=8 < 128 -> fallback path) --------------
    B, T, C, H = 2, 8, 32, 4
    kx, kp = jax.random.split(k_small)
    x = jax.random.normal(kx, (B, T, C), dtype=jnp.float32)
    params, params_ref = make_params(kp, C)
    bias = causal_bias(T)

    out = jax.block_until_ready(
        self_attention_forward(x, params, H, attention_bias=bias))
    ref = reference_forward(x, params_ref, H, attention_bias=bias)
    assert out.shape == (B, T, C)
    err = float(jnp.max(jnp.abs(out - ref)))
    assert jnp.allclose(out, ref, atol=5e-2, rtol=5e-2), f"bias path {err}"

    out_nb = jax.block_until_ready(self_attention_forward(x, params, H))
    ref_nb = reference_forward(x, params_ref, H)
    err_nb = float(jnp.max(jnp.abs(out_nb - ref_nb)))
    assert jnp.allclose(out_nb, ref_nb, atol=5e-2, rtol=5e-2), (
        f"no-bias path {err_nb}")

    # ------- Lane-aligned config (D=128 -> flat transposeless path, ----------
    # ------- in-kernel causal mask, masked-block skipping)          ----------
    B2, H2, D2, T2 = 2, 2, 128, 256
    C2 = H2 * D2
    kx2, kp2 = jax.random.split(k_big)
    x2 = jax.random.normal(kx2, (B2, T2, C2), dtype=jnp.float32) * 0.5
    params2, params2_ref = make_params(kp2, C2)

    out2 = jax.block_until_ready(
        self_attention_forward(x2, params2, H2, causal=True))
    ref2 = reference_forward(x2, params2_ref, H2,
                             attention_bias=causal_bias(T2))
    err2 = float(jnp.max(jnp.abs(out2 - ref2)))
    assert out2.shape == (B2, T2, C2)
    assert jnp.allclose(out2, ref2, atol=5e-2, rtol=5e-2), (
        f"flat causal path {err2}")

    print("KERNEL_OK")
</pallas_src>

<mosaic_0001>
module attributes {stable_mosaic.version = 11 : i64} {
  func.func @_linear_kernel(%arg0: i32, %arg1: i32, %arg2: i32, %arg3: memref<16x32xbf16, #tpu.memory_space<vmem>>, %arg4: memref<32x96xbf16, #tpu.memory_space<vmem>>, %arg5: memref<1x96xf32, #tpu.memory_space<vmem>>, %arg6: memref<16x96xbf16, #tpu.memory_space<vmem>>, %arg7: memref<16x96xf32, #tpu.memory_space<vmem>>) attributes {dimension_semantics = [#tpu.dimension_semantics<parallel>, #tpu.dimension_semantics<parallel>, #tpu.dimension_semantics<arbitrary>], iteration_bounds = array<i64: 1, 1, 1>, scalar_prefetch = 0 : i64, scratch_operands = 1 : i64, tpu.core_type = #tpu.core_type<tc>, window_params = [{transform_indices = @transform_0, window_bounds = array<i64: 16, 32>}, {transform_indices = @transform_1, window_bounds = array<i64: 32, 96>}, {transform_indices = @transform_2, window_bounds = array<i64: 1, 96>}, {transform_indices = @transform_3, window_bounds = array<i64: 16, 96>}]} {
    %c0_i32 = arith.constant 0 : i32
    %0 = arith.cmpi eq, %arg2, %c0_i32 : i32
    %1 = arith.extui %0 : i1 to i32
    %c0_i32_0 = arith.constant 0 : i32
    %2 = arith.cmpi ne, %1, %c0_i32_0 : i32
    scf.if %2 {
      %cst_10 = arith.constant 0.000000e+00 : f32
      %12 = vector.broadcast %cst_10 : f32 to vector<16x96xf32>
      %c0_11 = arith.constant 0 : index
      %c0_12 = arith.constant 0 : index
      %13 = vector.load %arg7[%c0_11, %c0_12] : memref<16x96xf32, #tpu.memory_space<vmem>>, vector<16x96xf32>
      tpu.vector_store %arg7[%c0_11, %c0_12], %12 {strides = array<i32>} : memref<16x96xf32, #tpu.memory_space<vmem>>, vector<16x96xf32>,
    } else {
    }
    %c0 = arith.constant 0 : index
    %c0_1 = arith.constant 0 : index
    %3 = vector.load %arg7[%c0, %c0_1] : memref<16x96xf32, #tpu.memory_space<vmem>>, vector<16x96xf32>
    %c0_2 = arith.constant 0 : index
    %c0_3 = arith.constant 0 : index
    %4 = vector.load %arg3[%c0_2, %c0_3] : memref<16x32xbf16, #tpu.memory_space<vmem>>, vector<16x32xbf16>
    %c0_4 = arith.constant 0 : index
    %c0_5 = arith.constant 0 : index
    %5 = vector.load %arg4[%c0_4, %c0_5] : memref<32x96xbf16, #tpu.memory_space<vmem>>, vector<32x96xbf16>
    %cst = arith.constant dense<0.000000e+00> : vector<16x96xf32>
    %6 = tpu.matmul %4, %5, %cst {dimension_numbers = #tpu.dot_dimension_numbers<[1], [0], [0], [1], [0, 0, 1, 1], [], []>} : vector<16x32xbf16>, vector<32x96xbf16>, vector<16x96xf32> -> vector<16x96xf32>
    %7 = arith.addf %3, %6 : vector<16x96xf32>
    %c0_6 = arith.constant 0 : index
    %c0_7 = arith.constant 0 : index
    %8 = vector.load %arg7[%c0_6, %c0_7] : memref<16x96xf32, #tpu.memory_space<vmem>>, vector<16x96xf32>
    tpu.vector_store %arg7[%c0_6, %c0_7], %7 {strides = array<i32>} : memref<16x96xf32, #tpu.memory_space<vmem>>, vector<16x96xf32>,
    %c0_i32_8 = arith.constant 0 : i32
    %9 = arith.cmpi eq, %arg2, %c0_i32_8 : i32
    %10 = arith.extui %9 : i1 to i32
    %c0_i32_9 = arith.constant 0 : i32
    %11 = arith.cmpi ne, %10, %c0_i32_9 : i32
    scf.if %11 {
      %c0_10 = arith.constant 0 : index
      %c0_11 = arith.constant 0 : index
      %12 = vector.load %arg7[%c0_10, %c0_11] : memref<16x96xf32, #tpu.memory_space<vmem>>, vector<16x96xf32>
      %c0_12 = arith.constant 0 : index
      %c0_13 = arith.constant 0 : index
      %13 = vector.load %arg5[%c0_12, %c0_13] : memref<1x96xf32, #tpu.memory_space<vmem>>, vector<1x96xf32>
      %14 = vector.broadcast %13 : vector<1x96xf32> to vector<16x96xf32>
      %15 = arith.addf %12, %14 : vector<16x96xf32>
      %16 = arith.truncf %15 : vector<16x96xf32> to vector<16x96xbf16>
      %c0_14 = arith.constant 0 : index
      %c0_15 = arith.constant 0 : index
      %17 = vector.load %arg6[%c0_14, %c0_15] : memref<16x96xbf16, #tpu.memory_space<vmem>>, vector<16x96xbf16>
      tpu.vector_store %arg6[%c0_14, %c0_15], %16 {strides = array<i32>} : memref<16x96xbf16, #tpu.memory_space<vmem>>, vector<16x96xbf16>,
    } else {
    }
    return
  }
  func.func @transform_0(%arg0: i32, %arg1: i32, %arg2: i32) -> (i32, i32) {
    %c0_i32 = arith.constant 0 : i32
    return %arg0, %arg2 : i32, i32
  }
  func.func @transform_1(%arg0: i32, %arg1: i32, %arg2: i32) -> (i32, i32) {
    %c0_i32 = arith.constant 0 : i32
    return %arg2, %arg1 : i32, i32
  }
  func.func @transform_2(%arg0: i32, %arg1: i32, %arg2: i32) -> (i32, i32) {
    %c0_i32 = arith.constant 0 : i32
    %c0_i32_0 = arith.constant 0 : i32
    return %c0_i32, %arg1 : i32, i32
  }
  func.func @transform_3(%arg0: i32, %arg1: i32, %arg2: i32) -> (i32, i32) {
    %c0_i32 = arith.constant 0 : i32
    return %arg0, %arg1 : i32, i32
  }
}

</mosaic_0001>

<llo_original>
// kernel: tpu_custom_call.1
$region0: #{tpu_custom_call.1}
  #allocation0 [shape = 'u32[]', space=smem, size = 0x4, offset = 0x4, fixed_abs, tag = 'smem constant byte address 0x4 - core index']
  #allocation1 [shape = 'u32[144,128]{1,0:T(1,128)}', space=vmem, size = 0x12000, scoped, tag = 'internal scratch']
  #allocation2 [shape = 'f32[16,96]{1,0:T(8,128)}', space=vmem, size = 0x2000, scoped, tag = 'scratch operand']
  %s0 = inlined_call_operand.hbm [shape: bf16[16,32], index: 0, kind: input, shape index: {}]
  %s1 = inlined_call_operand.hbm [shape: bf16[32,96], index: 1, kind: input, shape index: {}]
  %s2 = inlined_call_operand.vmem [shape: f32[1,96], index: 2, kind: input, shape index: {}]
  %s3 = inlined_call_operand.hbm [shape: bf16[16,96], index: 3, kind: output, shape index: {}]
  %s4 = sld [smem:[#allocation0]]
  $region38: #{tpu_custom_call.1} parent=0
    _
  %s6 = ssub.s32 1, %s4
  %s7 = scalar_select 0, %s6, %s4
  $region1: #{tpu_custom_call.1} parent=0
    #allocation3 [shape = 'u8[4096]{0}', space=vmem, size = 0x1000, scoped, tag = 'input window, operand 0, single buffered']
    #allocation4 [shape = 's32[1]{0}', space=sflag, size = 0x4, scoped, tag = 'scoped memory for tpu_custom_call.1']
    #allocation5 [shape = 's32[1]{0}', space=sflag, size = 0x4, scoped, tag = 'scoped memory for tpu_custom_call.1']
    #allocation6 [shape = 'u8[8192]{0}', space=vmem, size = 0x2000, scoped, tag = 'input window, operand 1, single buffered']
    #allocation7 [shape = 's32[1]{0}', space=sflag, size = 0x4, scoped, tag = 'scoped memory for tpu_custom_call.1']
    #allocation8 [shape = 'u8[4096]{0}', space=vmem, size = 0x1000, scoped, tag = 'output window, operand 0, single buffered']
    %8 = vsyncpa [#allocation4], 0
    %9 = vsyncpa [#allocation7], 0
    %10 = vsyncpa [#allocation5], 0
    // Predicated region
    $region2: #{tpu_custom_call.1} parent=1 // pred_check
      _
    $region3: #{tpu_custom_call.1} parent=1 // pred_check_branch
      %12 = sbr.rel (0) target = $region5
    $region4: #{tpu_custom_call.1} parent=1 // pred_region
      %s14 = ssub.s32 128, 128
      %15 = vsyncadd [#allocation4], %s14
      %s16 = sshll.u32 [#allocation3], 4
      %s17 = int_to_ptr.vmem [resolvable:$true] %s16
      %22 = dma.hbm_to_vmem [thread:$0]  %s0, 128, %s17, [#allocation4], 64, 64, 4
    $region5: #{tpu_custom_call.1} parent=1 // pred_fallthru
      _
    // Predicated region
    $region6: #{tpu_custom_call.1} parent=1 // pred_check
      _
    $region7: #{tpu_custom_call.1} parent=1 // pred_check_branch
      %24 = sbr.rel (0) target = $region9
    $region8: #{tpu_custom_call.1} parent=1 // pred_region
      %s26 = ssub.s32 256, 256
      %27 = vsyncadd [#allocation7], %s26
      %s28 = sshll.u32 [#allocation6], 4
      %s29 = int_to_ptr.vmem [resolvable:$true] %s28
      %34 = dma.hbm_to_vmem [thread:$0]  %s1, 256, %s29, [#allocation7], 64, 64, 4
    $region9: #{tpu_custom_call.1} parent=1 // pred_fallthru
      _
    // Predicated region
    $region10: #{tpu_custom_call.1} parent=1 // pred_check
      _
    $region11: #{tpu_custom_call.1} parent=1 // pred_check_branch
      %36 = sbr.rel (0) target = $region13
    $region12: #{tpu_custom_call.1} parent=1 // pred_region
      _
    $region13: #{tpu_custom_call.1} parent=1 // pred_fallthru
      _
    // Predicated region
    $region14: #{tpu_custom_call.1} parent=1 // pred_check
      _
    $region15: #{tpu_custom_call.1} parent=1 // pred_check_branch
      %38 = sbr.rel (0) target = $region17
    $region16: #{tpu_custom_call.1} parent=1 // pred_region
      %39 = dma.done [#allocation4], 128
    $region17: #{tpu_custom_call.1} parent=1 // pred_fallthru
      _
    // Predicated region
    $region18: #{tpu_custom_call.1} parent=1 // pred_check
      _
    $region19: #{tpu_custom_call.1} parent=1 // pred_check_branch
      %41 = sbr.rel (0) target = $region21
    $region20: #{tpu_custom_call.1} parent=1 // pred_region
      %42 = dma.done [#allocation7], 256
    $region21: #{tpu_custom_call.1} parent=1 // pred_fallthru
      _
    %p44 = scmp.eq.s32.totalorder 0, 0
    // Predicated region
    $region22: #{tpu_custom_call.1} parent=1 // pred_check
      %p45 = pneg %p44
    $region23: #{tpu_custom_call.1} parent=1 // pred_check_branch
      %47 = sbr.rel (%p45) target = $region25
    $region24: #{tpu_custom_call.1} parent=1 // pred_region
      %vm48 = vcmask 785408
      %49 = vst.msk [vmem:[#allocation2] sm:$0xff] %vm48, 0.0
      %50 = vst.msk [vmem:[#allocation2 + $0x8] sm:$0xff] %vm48, 0.0
    $region25: #{tpu_custom_call.1} parent=1 // pred_fallthru
      _
    %v51 = vld [vmem:[#allocation2] sm:$0xff]
    %v52 = vld [vmem:[#allocation2 + $0x8] sm:$0xff]
    %v53 = vld [vmem:[#allocation3] sm:$0xf]
    %v54 = vld [vmem:[#allocation3 + $0x4] sm:$0xf]
    %v55 = vld [vmem:[#allocation6] sm:$0xf]
    %v56 = vld [vmem:[#allocation6 + $0x4] sm:$0xf]
    %v57 = vld [vmem:[#allocation6 + $0x8] sm:$0xf]
    %v58 = vld [vmem:[#allocation6 + $0xc] sm:$0xf]
    %v61 = vunpack.c.l.b16 %v53
    %v62 = vunpack.c.l.b16 %v54
    %v63 = vpack.c.b16 %v62, %v61
    %v68 = vunpack.c.l.b16 %v55
    %v69 = vunpack.c.l.b16 %v56
    %v70 = vunpack.c.l.b16 %v57
    %v71 = vunpack.c.l.b16 %v58
    %v72 = vpack.c.b16 %v69, %v68
    %v73 = vpack.c.b16 %v71, %v70
    %vm76 = vcmask 261120
    %v78 = vsel %vm76, %v63, 0
    %80 = vmatprep.subr.bf16.mxu0 0
    %81 = vmatpush1.bf16.msra.mxu0 0
    %82 = vmatprep.subr.bf16.mxu0 0
    %83 = vmatpush1.bf16.msra.mxu0 0
    %84 = vmatprep.subr.bf16.mxu0 0
    %85 = vmatpush1.bf16.msra.mxu0 0
    %86 = vmatprep.subr.bf16.mxu0 0
    %87 = vmatpush1.bf16.msra.mxu0 0
    %88 = vmatprep.subr.bf16.mxu0 0
    %89 = vmatpush1.bf16.msra.mxu0 0
    %90 = vmatprep.subr.bf16.mxu0 0
    %91 = vmatpush1.bf16.msra.mxu0 0
    %92 = vmatprep.subr.bf16.mxu0 0
    %93 = vmatpush1.bf16.msra.mxu0 %v73
    %94 = vmatprep.subr.bf16.mxu0 0
    %95 = vmatpush1.bf16.msra.mxu0 %v72
    %96 = vmatprep.subr.bf16.mxu0 0
    %97 = vmatpush2.bf16.msra.mxu0 0
    %98 = vmatprep.subr.bf16.mxu0 0
    %99 = vmatpush2.bf16.msra.mxu0 0
    %100 = vmatprep.subr.bf16.mxu0 0
    %101 = vmatpush2.bf16.msra.mxu0 0
    %102 = vmatprep.subr.bf16.mxu0 0
    %103 = vmatpush2.bf16.msra.mxu0 0
    %104 = vmatprep.subr.bf16.mxu0 0
    %105 = vmatpush2.bf16.msra.mxu0 0
    %106 = vmatprep.subr.bf16.mxu0 0
    %107 = vmatpush2.bf16.msra.mxu0 0
    %108 = vmatprep.subr.bf16.mxu0 0
    %109 = vmatpush2.bf16.msra.mxu0 0
    %110 = vmatprep.subr.bf16.mxu0 0
    %111 = vmatpush2.bf16.msra.mxu0 0
    %112 = vmatprep.mubr.bf16.mxu0 0
    %113 = vmatmul.mubr.bf16.gmra.mxu0 %v78
    %v114 = vpop.f32.mrf.mxu0
    %v115 = vadd.f32 0.0, %v114
    %v116 = vpop.f32.mrf.mxu0
    %v117 = vpop.f32.mrf.mxu0
    %v118 = vadd.f32 0.0, %v117
    %v119 = vpop.f32.mrf.mxu0
    %120 = vdwg.mxu0
    %v121 = vadd.f32 %v51, %v115
    %v122 = vadd.f32 %v52, %v118
    %vm123 = vcmask 785408
    %124 = vst.msk [vmem:[#allocation2] sm:$0xff] %vm123, %v121
    %125 = vst.msk [vmem:[#allocation2 + $0x8] sm:$0xff] %vm123, %v122
    // Predicated region
    $region26: #{tpu_custom_call.1} parent=1 // pred_check
      %p126 = pneg %p44
    $region27: #{tpu_custom_call.1} parent=1 // pred_check_branch
      %128 = sbr.rel (%p126) target = $region29
    $region28: #{tpu_custom_call.1} parent=1 // pred_region
      %v129 = vld [vmem:[#allocation2] sm:$0xff]
      %v130 = vld [vmem:[#allocation2 + $0x8] sm:$0xff]
      %v131 = vld [vmem:[%s2] sm:$0x1]
      %v133 = vlaneseq
      %v134 = vshrl.u32 %v133, 7
      %v135 = vsub.s32 0, %v134
      %v136 = vrot.slane %v131, %v135
      %v138 = vadd.f32 %v129, %v136
      %v139 = vadd.f32 %v130, %v136
      %v140 = vpack.c.bf16 %v139, %v138
      %v142 = vunpack.c.l.b16 %v140
      %v143 = vunpack.c.h.b16 %v140
      %v144 = vpack.c.b16 %v142, %v142
      %v145 = vpack.c.b16 %v143, %v143
      %vm148 = vcmask 781312
      %149 = vst.msk [vmem:[#allocation8] sm:$0xf] %vm148, %v144
      %150 = vst.msk [vmem:[#allocation8 + $0x4] sm:$0xf] %vm148, %v145
    $region29: #{tpu_custom_call.1} parent=1 // pred_fallthru
      _
    // Predicated region
    $region30: #{tpu_custom_call.1} parent=1 // pred_check
      _
    $region31: #{tpu_custom_call.1} parent=1 // pred_check_branch
      %152 = sbr.rel (0) target = $region33
    $region32: #{tpu_custom_call.1} parent=1 // pred_region
      %s154 = ssub.s32 128, 128
      %155 = vsyncadd [#allocation5], %s154
      %s156 = sshll.u32 [#allocation8], 4
      %s157 = int_to_ptr.vmem [resolvable:$true] %s156
      %162 = dma.vmem_to_hbm [thread:$0]  %s157, 128, %s3, [#allocation5], 64, 64, 4
    $region33: #{tpu_custom_call.1} parent=1 // pred_fallthru
      _
    // Predicated region
    $region34: #{tpu_custom_call.1} parent=1 // pred_check
      _
    $region35: #{tpu_custom_call.1} parent=1 // pred_check_branch
      %164 = sbr.rel (0) target = $region37
    $region36: #{tpu_custom_call.1} parent=1 // pred_region
      %165 = dma.done [#allocation5], 128
    $region37: #{tpu_custom_call.1} parent=1 // pred_fallthru
      _
    %166 = vsyncpa [#allocation4], 1
    %167 = vsyncpa [#allocation7], 1
    %168 = vsyncpa [#allocation5], 1

</llo_original>
